<compile_context>
chip_gen: v7x
topology: tpu7x:2x2x1
jax: 0.10.0
libtpu: 0.0.40
codegen_flags: <defaults>
</compile_context>

<pallas_src>
import math

import jax
import jax.numpy as jnp
from jax.experimental import pallas as pl
from jax.experimental.pallas import tpu as pltpu


_TARGET_BLOCK_BYTES = 2 << 20   # 2 MiB blocks: 2 arrays x 2 bufs = 8 MiB VMEM
_MIN_BLOCK_BYTES = 1 << 20      # never shrink blocks below ~1 MiB
_MIN_PIPELINE_STEPS = 4         # a copy only needs a few in-flight steps


# ---------------------------------------------------------------------------
# Path 1 (default kernel): single streaming HBM -> HBM DMA.
# ---------------------------------------------------------------------------
def _dma_copy_kernel(x_hbm_ref, o_hbm_ref, sem):
    cp = pltpu.make_async_copy(x_hbm_ref, o_hbm_ref, sem)
    cp.start()
    cp.wait()


def _flatten_dma(x2):
    total_bytes = x2.size * jnp.dtype(x2.dtype).itemsize
    return pl.pallas_call(
        _dma_copy_kernel,
        out_shape=jax.ShapeDtypeStruct(x2.shape, x2.dtype),
        in_specs=[pl.BlockSpec(memory_space=pl.ANY)],
        out_specs=pl.BlockSpec(memory_space=pl.ANY),
        scratch_shapes=[pltpu.SemaphoreType.DMA],
        compiler_params=pltpu.CompilerParams(has_side_effects=True),
        cost_estimate=pl.CostEstimate(
            flops=0, transcendentals=0, bytes_accessed=2 * total_bytes),
    )(x2)


# ---------------------------------------------------------------------------
# Path 2: lane-dense, BlockSpec-pipelined VMEM copy.
# ---------------------------------------------------------------------------
def _copy_kernel(x_ref, o_ref):
    o_ref[...] = x_ref[...]


def _choose_flat_tiling(total, dtype):
    """Tile a flat slab of `total` elems as (rows, lane) + (r_blk, lane) blocks."""
    itemsize = jnp.dtype(dtype).itemsize
    pack = {4: 8, 2: 16, 1: 32}.get(itemsize, 8)   # sublane pack per dtype width

    candidates = [c for c in (1024, 512, 256, 128) if total % c == 0]
    if not candidates:
        return None   # ragged total: caller uses the HBM->HBM DMA path
    # Prefer the (widest) lane candidate whose row count is sublane-pack
    # aligned -> fully unmasked vld/vst.
    aligned = [c for c in candidates if (total // c) % pack == 0]
    lane = aligned[0] if aligned else candidates[0]
    rows = total // lane

    if rows % pack != 0:
        # Only a full-extent row block is legal; accept it only if it is small
        # enough to be harmless, otherwise fall back to the DMA path.
        if rows * lane * itemsize <= _TARGET_BLOCK_BYTES:
            return rows, lane, rows
        return None

    r_blk = (_TARGET_BLOCK_BYTES // (lane * itemsize)) // pack * pack
    r_blk = max(pack, min(r_blk, rows))
    while rows % r_blk != 0:
        r_blk -= pack

    # Only add pipeline steps while blocks stay >= ~1 MiB.
    min_r_blk = max(pack, (_MIN_BLOCK_BYTES // (lane * itemsize)) // pack * pack)
    while rows // r_blk < _MIN_PIPELINE_STEPS and r_blk // 2 >= min_r_blk:
        nxt = r_blk // 2
        if nxt % pack != 0 or rows % nxt != 0:
            break
        r_blk = nxt
    return rows, lane, r_blk


def _flatten_vmem(x2, n, feat):
    tiling = _choose_flat_tiling(n * feat, x2.dtype)
    if tiling is None:
        # Ragged shapes: the single-DMA path handles any shape cleanly.
        return _flatten_dma(x2)

    rows, lane, r_blk = tiling
    itemsize = jnp.dtype(x2.dtype).itemsize
    blk_bytes = r_blk * lane * itemsize
    xt = x2.reshape(rows, lane)   # metadata-only retile (same flat order)

    out = pl.pallas_call(
        _copy_kernel,
        out_shape=jax.ShapeDtypeStruct((rows, lane), x2.dtype),
        grid=(rows // r_blk,),
        in_specs=[pl.BlockSpec((r_blk, lane), lambda i: (i, 0))],
        out_specs=pl.BlockSpec((r_blk, lane), lambda i: (i, 0)),
        compiler_params=pltpu.CompilerParams(
            dimension_semantics=("parallel",),   # v7x two-TC split; no-op on v5e/v6e
            vmem_limit_bytes=max(4 * blk_bytes + (2 << 20), 16 << 20)),
        cost_estimate=pl.CostEstimate(
            flops=0, transcendentals=0, bytes_accessed=2 * rows * lane * itemsize),
    )(xt)
    return out.reshape(n, feat)


# ---------------------------------------------------------------------------
# Public wrapper: Flatten.forward
# ---------------------------------------------------------------------------
def flatten(x, mode="dma"):
    """Pallas equivalent of Flatten.forward: x.view(batch_size, -1).

    mode="view": metadata-only reshape (what XLA does anyway; zero HBM traffic).
    mode="dma" : explicit kernel, single HBM->HBM streaming DMA (default).
    mode="vmem": explicit kernel, lane-dense BlockSpec-pipelined VMEM copy.
    """
    n = x.shape[0]
    feat = math.prod(x.shape[1:])
    x2 = x.reshape(n, feat)   # metadata-only, row-major (matches torch .view)

    if mode == "view":
        return x2
    if mode == "vmem":
        return _flatten_vmem(x2, n, feat)
    return _flatten_dma(x2)


if __name__ == "__main__":
    key = jax.random.PRNGKey(0)

    # Small NCHW input consistent with an MNIST-style conv feature map.
    x = jax.random.normal(key, (2, 4, 16, 16), dtype=jnp.float32)
    ref = x.reshape(2, -1)
    for mode in ("view", "dma", "vmem"):
        y = jax.block_until_ready(flatten(x, mode=mode))
        assert y.shape == (2, 4 * 16 * 16), (mode, y.shape)
        assert jnp.array_equal(y, ref), mode

    # Slightly larger batch to exercise multi-row tilings as well.
    x2 = jax.random.normal(jax.random.PRNGKey(1), (32, 4, 16, 16), dtype=jnp.float32)
    ref2 = x2.reshape(32, -1)
    for mode in ("dma", "vmem"):
        y2 = jax.block_until_ready(flatten(x2, mode=mode))
        assert y2.shape == (32, 4 * 16 * 16), (mode, y2.shape)
        assert jnp.array_equal(y2, ref2), mode

    print("KERNEL_OK")
</pallas_src>

<mosaic_0001>
module attributes {stable_mosaic.version = 11 : i64} {
  func.func @_dma_copy_kernel(%arg0: memref<2x1024xf32, #tpu.memory_space<any>>, %arg1: memref<2x1024xf32, #tpu.memory_space<any>>, %arg2: memref<!tpu.dma_semaphore, #tpu.memory_space<semaphore_mem>>) attributes {dimension_semantics = [], scalar_prefetch = 0 : i64, scratch_operands = 1 : i64, tpu.core_type = #tpu.core_type<tc>} {
    tpu.enqueue_dma source(%arg0 : memref<2x1024xf32, #tpu.memory_space<any>>) target(%arg1 : memref<2x1024xf32, #tpu.memory_space<any>>) target_semaphore(%arg2 : memref<!tpu.dma_semaphore, #tpu.memory_space<semaphore_mem>>)
    tpu.wait_dma2 semaphore(%arg2 : memref<!tpu.dma_semaphore, #tpu.memory_space<semaphore_mem>>) src(%arg0 : memref<2x1024xf32, #tpu.memory_space<any>>) dst(%arg1 : memref<2x1024xf32, #tpu.memory_space<any>>)
    return
  }
}

</mosaic_0001>

<llo_original>
// kernel: tpu_custom_call.1
$region0: #{tpu_custom_call.1}
  #allocation0 [shape = 'u32[]', space=smem, size = 0x4, offset = 0x4, fixed_abs, tag = 'smem constant byte address 0x4 - core index']
  #allocation1 [shape = 'u32[144,128]{1,0:T(1,128)}', space=vmem, size = 0x12000, scoped, tag = 'internal scratch']
  #allocation2 [shape = 's32[1]{0}', space=sflag, size = 0x4, scoped, tag = 'scratch operand']
  #allocation3 [shape = 's32[]', space=sflag, size = 0x4, offset = 0, fixed_abs, tag = 'sflag constant byte address 0x0 - dummy sync flag']
  #allocation4 [shape = 'u32[0]{0}', space=smem, size = 0, offset = 0, fixed_abs, tag = 'smem constant byte address 0x0 - null']
  %s0 = inlined_call_operand.hbm [shape: f32[2,1024], index: 0, kind: input, shape index: {}]
  %s1 = inlined_call_operand.hbm [shape: f32[2,1024], index: 1, kind: output, shape index: {}]
  %s2 = sld [smem:[#allocation0]]
  $region2: #{tpu_custom_call.1} parent=0
    _
  %s4 = ssub.s32 1, %s2
  %s5 = scalar_select 0, %s4, %s2
  %s7 = sshll.u32 1, 14
  %s8 = sxor.u32 4294967295, %s7
  %s11 = sshll.u32 3, 24
  %s12 = sxor.u32 4294967295, %s11
  %s13 = sand.u32 0, %s12
  %s15 = sor.u32 %s13, 0
  %18 = dma.general %s0, 256, %s1, [#allocation2], [#allocation3], [#allocation4], %s15, 0
  %s19 = smul.u32 2, 1
  %s20 = smul.u32 %s19, 8
  %s21 = sshll.u32 %s20, 4
  %22 = dma.done [#allocation2], %s21
  %23 = vsyncmov [#allocation2]
  %s24 = vpop.sfrf %23
  %p25 = scmp.eq.s32.totalorder %s24, 0
  %p26 = pneg %p25
  %28 = shalt.err (%p26)

</llo_original>
